<compile_context>
chip_gen: v5e
topology: v5e:2x2
jax: 0.10.0
libtpu: 0.0.40
codegen_flags: <defaults>
</compile_context>

<pallas_src>
import random
from functools import partial

import jax
import jax.numpy as jnp
import numpy as np
from jax.experimental import pallas as pl
from jax.experimental.pallas import tpu as pltpu

_LANE = 128
# Pipeline footprint = (input + output) x double-buffer = 4 live block buffers.
_VMEM_PIPELINE_BUDGET = 24 * 1024 * 1024
_VMEM_LIMIT_BYTES = 32 * 1024 * 1024
_MAX_BATCH_BLOCK = 64  # bound in-kernel unroll over the batch sub-dimension


def _specaug_kernel(fs_ref, fw_ref, ts_ref, tw_ref, x_ref, o_ref, *,
                    freq_masks, time_masks, b_block, t_tile, batch):
    """Block: (b_block, F, t_tile).  Separable per-freq / per-time bool masks."""
    b0 = pl.program_id(0) * b_block
    t_off = pl.program_id(1) * t_tile
    _, F, Tt = x_ref.shape

    # Mask vectors built with comparisons over F and Tt only (not F*Tt); the
    # only (F, Tt)-sized ops are the final boolean OR + select.
    row_ids = jax.lax.broadcasted_iota(jnp.int32, (F, 1), 0)           # freq idx
    col_ids = jax.lax.broadcasted_iota(jnp.int32, (1, Tt), 1) + t_off  # time idx

    for bb in range(b_block):
        # Clamp so a padded trailing batch block never indexes SMEM out of
        # bounds (its output rows are discarded by Pallas anyway).
        bidx = jnp.minimum(b0 + bb, batch - 1)

        mask_f = row_ids < 0                      # all-False (F, 1) bool init
        for i in range(freq_masks):
            s = fs_ref[bidx * freq_masks + i]
            w = fw_ref[bidx * freq_masks + i]
            mask_f = mask_f | ((row_ids >= s) & (row_ids < s + w))

        mask_t = col_ids < 0                      # all-False (1, Tt) bool init
        for i in range(time_masks):
            s = ts_ref[bidx * time_masks + i]
            w = tw_ref[bidx * time_masks + i]
            mask_t = mask_t | ((col_ids >= s) & (col_ids < s + w))

        x = x_ref[bb]                             # (F, Tt), input dtype
        # Boolean broadcast OR + scalar-zero select == exact masked_fill
        # semantics (no zero tensor materialized, no dtype promotion).
        o_ref[bb] = jnp.where(mask_f | mask_t, jnp.zeros((), x.dtype), x)


def _choose_blocks(B, F, T, itemsize):
    """Pick (b_block, t_tile) from the VMEM budget; grid uses cdiv."""
    per_buf = _VMEM_PIPELINE_BUDGET // 4
    slab = F * T * itemsize                       # one full batch-item slab

    if slab <= per_buf:
        # Whole time axis per step; amortize the ~0.35us/step fixed overhead
        # by packing several batch items into one block.
        t_tile = T
        b_block = max(1, min(B, per_buf // max(slab, 1), _MAX_BATCH_BLOCK))
    else:
        # Large spectrogram: lane-dense (multiple-of-128) time tile derived
        # from the budget; last block along T may be partial (writes dropped).
        b_block = 1
        cols = per_buf // (F * itemsize)
        t_tile = max(_LANE, (cols // _LANE) * _LANE)

    n_b = pl.cdiv(B, b_block)
    n_t = pl.cdiv(T, t_tile)

    # v7x shards "parallel" grid axes across its 2 TensorCores; make sure at
    # least 2 programs exist so a core is not idle (no-op on v5e/v6e).
    if n_b * n_t == 1:
        if T > _LANE:
            t_tile = _LANE * pl.cdiv(pl.cdiv(T, 2), _LANE)
            n_t = pl.cdiv(T, t_tile)
        elif B > 1:
            b_block = pl.cdiv(B, 2)
            n_b = pl.cdiv(B, b_block)

    return b_block, t_tile, n_b, n_t


def spec_augment(x, freq_starts, freq_widths, time_starts, time_widths, *,
                 freq_masks, time_masks):
    """x: [B, F, T]; mask params: flat [B * n_masks] int32 arrays.

    NOTE: x's HBM buffer is donated (in-place masked fill); do not reuse x
    after this call.
    """
    B, F, T = x.shape
    itemsize = jnp.dtype(x.dtype).itemsize
    b_block, t_tile, n_b, n_t = _choose_blocks(B, F, T, itemsize)

    kernel = partial(_specaug_kernel, freq_masks=freq_masks,
                     time_masks=time_masks, b_block=b_block, t_tile=t_tile,
                     batch=B)

    return pl.pallas_call(
        kernel,
        out_shape=jax.ShapeDtypeStruct((B, F, T), x.dtype),
        grid_spec=pltpu.PrefetchScalarGridSpec(
            num_scalar_prefetch=4,
            grid=(n_b, n_t),
            in_specs=[
                pl.BlockSpec((b_block, F, t_tile),
                             lambda b, t, fs, fw, ts, tw: (b, 0, t)),
            ],
            out_specs=pl.BlockSpec((b_block, F, t_tile),
                                   lambda b, t, fs, fw, ts, tw: (b, 0, t)),
        ),
        compiler_params=pltpu.CompilerParams(
            dimension_semantics=("parallel", "parallel"),
            vmem_limit_bytes=_VMEM_LIMIT_BYTES),
        # Alias x (flat input index 4: after the 4 scalar-prefetch arrays)
        # to the single output -> in-place masked fill, no second HBM buffer.
        input_output_aliases={4: 0},
        cost_estimate=pl.CostEstimate(
            flops=3 * B * F * T,
            transcendentals=0,
            bytes_accessed=2 * B * F * T * itemsize),
    )(freq_starts, freq_widths, time_starts, time_widths, x)


def _draw_masks(rng, B, F, T, freq_masks, time_masks, freq_width, time_width):
    """Mirror the PyTorch module's RNG usage exactly (order + int(uniform))."""
    fs = np.zeros((B, max(freq_masks, 1)), np.int32)
    fw = np.zeros((B, max(freq_masks, 1)), np.int32)
    ts = np.zeros((B, max(time_masks, 1)), np.int32)
    tw = np.zeros((B, max(time_masks, 1)), np.int32)
    for idx in range(B):
        for i in range(freq_masks):
            fs[idx, i] = int(rng.uniform(0, F - freq_width))
            fw[idx, i] = int(rng.uniform(0, freq_width))
        for i in range(time_masks):
            ts[idx, i] = int(rng.uniform(0, T - time_width))
            tw[idx, i] = int(rng.uniform(0, time_width))
    return fs, fw, ts, tw


def _reference(x_np, fs, fw, ts, tw, freq_masks, time_masks):
    B = x_np.shape[0]
    mask = np.zeros_like(x_np, dtype=bool)
    for idx in range(B):
        for i in range(freq_masks):
            mask[idx, fs[idx, i]:fs[idx, i] + fw[idx, i], :] = True
        for i in range(time_masks):
            mask[idx, :, ts[idx, i]:ts[idx, i] + tw[idx, i]] = True
    out = x_np.copy()
    out[mask] = 0.0
    return out


if __name__ == "__main__":
    # Small shapes consistent with the module's [batch, freq, time] input.
    # T=384 exercises the cdiv time tiling (2 programs, partial last block).
    B, F, T = 2, 16, 384
    freq_masks, time_masks = 2, 2
    freq_width, time_width = 4, 16  # scaled down to fit the small spectrogram

    key = jax.random.PRNGKey(0)
    x = jax.random.normal(key, (B, F, T), dtype=jnp.float32)
    x_np = np.array(x)  # snapshot: x's buffer is donated via input aliasing

    host_rng = random.Random(0)  # deterministic, mirrors self._rng
    fs, fw, ts, tw = _draw_masks(host_rng, B, F, T,
                                 freq_masks, time_masks,
                                 freq_width, time_width)

    out = spec_augment(
        x,
        jnp.asarray(fs.reshape(-1)), jnp.asarray(fw.reshape(-1)),
        jnp.asarray(ts.reshape(-1)), jnp.asarray(tw.reshape(-1)),
        freq_masks=freq_masks, time_masks=time_masks)
    out = jax.block_until_ready(out)

    ref = _reference(x_np, fs, fw, ts, tw, freq_masks, time_masks)
    np.testing.assert_allclose(np.array(out), ref, rtol=0, atol=0)
    print("KERNEL_OK")
</pallas_src>

<mosaic_0001>
module attributes {stable_mosaic.version = 11 : i64} {
  func.func @_specaug_kernel(%arg0: i32, %arg1: i32, %arg2: memref<4xi32, #tpu.memory_space<smem>>, %arg3: memref<4xi32, #tpu.memory_space<smem>>, %arg4: memref<4xi32, #tpu.memory_space<smem>>, %arg5: memref<4xi32, #tpu.memory_space<smem>>, %arg6: memref<2x16x256xf32, #tpu.memory_space<vmem>>, %arg7: memref<2x16x256xf32, #tpu.memory_space<vmem>>) attributes {dimension_semantics = [#tpu.dimension_semantics<parallel>, #tpu.dimension_semantics<parallel>], iteration_bounds = array<i64: 1, 2>, scalar_prefetch = 4 : i64, scratch_operands = 0 : i64, tpu.core_type = #tpu.core_type<tc>, window_params = [{transform_indices = @transform_0, window_bounds = array<i64: 2, 16, 256>}, {transform_indices = @transform_1, window_bounds = array<i64: 2, 16, 256>}]} {
    %c2_i32 = arith.constant 2 : i32
    %0 = arith.muli %arg0, %c2_i32 : i32
    %c256_i32 = arith.constant 256 : i32
    %1 = arith.muli %arg1, %c256_i32 : i32
    %2 = tpu.iota {dimensions = array<i32: 0>} : vector<16x1xi32>
    %3 = tpu.iota {dimensions = array<i32: 1>} : vector<1x256xi32>
    %4 = vector.broadcast %1 : i32 to vector<1x256xi32>
    %5 = arith.addi %3, %4 : vector<1x256xi32>
    %c0_i32 = arith.constant 0 : i32
    %6 = arith.addi %0, %c0_i32 : i32
    %c1_i32 = arith.constant 1 : i32
    %7 = arith.minsi %6, %c1_i32 : i32
    %c0_i32_0 = arith.constant 0 : i32
    %8 = vector.broadcast %c0_i32_0 : i32 to vector<16x1xi32>
    %9 = arith.cmpi slt, %2, %8 : vector<16x1xi32>
    %c2_i32_1 = arith.constant 2 : i32
    %10 = arith.muli %7, %c2_i32_1 : i32
    %c0_i32_2 = arith.constant 0 : i32
    %11 = arith.addi %10, %c0_i32_2 : i32
    %12 = arith.index_cast %11 : i32 to index
    %13 = memref.load %arg2[%12] : memref<4xi32, #tpu.memory_space<smem>>
    %c2_i32_3 = arith.constant 2 : i32
    %14 = arith.muli %7, %c2_i32_3 : i32
    %c0_i32_4 = arith.constant 0 : i32
    %15 = arith.addi %14, %c0_i32_4 : i32
    %16 = arith.index_cast %15 : i32 to index
    %17 = memref.load %arg3[%16] : memref<4xi32, #tpu.memory_space<smem>>
    %18 = vector.broadcast %13 : i32 to vector<16x1xi32>
    %19 = arith.cmpi sge, %2, %18 : vector<16x1xi32>
    %20 = arith.addi %13, %17 : i32
    %21 = vector.broadcast %20 : i32 to vector<16x1xi32>
    %22 = arith.cmpi slt, %2, %21 : vector<16x1xi32>
    %23 = arith.andi %19, %22 : vector<16x1xi1>
    %24 = arith.ori %9, %23 : vector<16x1xi1>
    %c2_i32_5 = arith.constant 2 : i32
    %25 = arith.muli %7, %c2_i32_5 : i32
    %c1_i32_6 = arith.constant 1 : i32
    %26 = arith.addi %25, %c1_i32_6 : i32
    %27 = arith.index_cast %26 : i32 to index
    %28 = memref.load %arg2[%27] : memref<4xi32, #tpu.memory_space<smem>>
    %c2_i32_7 = arith.constant 2 : i32
    %29 = arith.muli %7, %c2_i32_7 : i32
    %c1_i32_8 = arith.constant 1 : i32
    %30 = arith.addi %29, %c1_i32_8 : i32
    %31 = arith.index_cast %30 : i32 to index
    %32 = memref.load %arg3[%31] : memref<4xi32, #tpu.memory_space<smem>>
    %33 = vector.broadcast %28 : i32 to vector<16x1xi32>
    %34 = arith.cmpi sge, %2, %33 : vector<16x1xi32>
    %35 = arith.addi %28, %32 : i32
    %36 = vector.broadcast %35 : i32 to vector<16x1xi32>
    %37 = arith.cmpi slt, %2, %36 : vector<16x1xi32>
    %38 = arith.andi %34, %37 : vector<16x1xi1>
    %39 = arith.ori %24, %38 : vector<16x1xi1>
    %c0_i32_9 = arith.constant 0 : i32
    %40 = vector.broadcast %c0_i32_9 : i32 to vector<1x256xi32>
    %41 = arith.cmpi slt, %5, %40 : vector<1x256xi32>
    %c2_i32_10 = arith.constant 2 : i32
    %42 = arith.muli %7, %c2_i32_10 : i32
    %c0_i32_11 = arith.constant 0 : i32
    %43 = arith.addi %42, %c0_i32_11 : i32
    %44 = arith.index_cast %43 : i32 to index
    %45 = memref.load %arg4[%44] : memref<4xi32, #tpu.memory_space<smem>>
    %c2_i32_12 = arith.constant 2 : i32
    %46 = arith.muli %7, %c2_i32_12 : i32
    %c0_i32_13 = arith.constant 0 : i32
    %47 = arith.addi %46, %c0_i32_13 : i32
    %48 = arith.index_cast %47 : i32 to index
    %49 = memref.load %arg5[%48] : memref<4xi32, #tpu.memory_space<smem>>
    %50 = vector.broadcast %45 : i32 to vector<1x256xi32>
    %51 = arith.cmpi sge, %5, %50 : vector<1x256xi32>
    %52 = arith.addi %45, %49 : i32
    %53 = vector.broadcast %52 : i32 to vector<1x256xi32>
    %54 = arith.cmpi slt, %5, %53 : vector<1x256xi32>
    %55 = arith.andi %51, %54 : vector<1x256xi1>
    %56 = arith.ori %41, %55 : vector<1x256xi1>
    %c2_i32_14 = arith.constant 2 : i32
    %57 = arith.muli %7, %c2_i32_14 : i32
    %c1_i32_15 = arith.constant 1 : i32
    %58 = arith.addi %57, %c1_i32_15 : i32
    %59 = arith.index_cast %58 : i32 to index
    %60 = memref.load %arg4[%59] : memref<4xi32, #tpu.memory_space<smem>>
    %c2_i32_16 = arith.constant 2 : i32
    %61 = arith.muli %7, %c2_i32_16 : i32
    %c1_i32_17 = arith.constant 1 : i32
    %62 = arith.addi %61, %c1_i32_17 : i32
    %63 = arith.index_cast %62 : i32 to index
    %64 = memref.load %arg5[%63] : memref<4xi32, #tpu.memory_space<smem>>
    %65 = vector.broadcast %60 : i32 to vector<1x256xi32>
    %66 = arith.cmpi sge, %5, %65 : vector<1x256xi32>
    %67 = arith.addi %60, %64 : i32
    %68 = vector.broadcast %67 : i32 to vector<1x256xi32>
    %69 = arith.cmpi slt, %5, %68 : vector<1x256xi32>
    %70 = arith.andi %66, %69 : vector<1x256xi1>
    %71 = arith.ori %56, %70 : vector<1x256xi1>
    %c0 = arith.constant 0 : index
    %c0_18 = arith.constant 0 : index
    %c0_19 = arith.constant 0 : index
    %72 = vector.load %arg6[%c0, %c0_18, %c0_19] : memref<2x16x256xf32, #tpu.memory_space<vmem>>, vector<1x16x256xf32>
    %73 = vector.shape_cast %72 : vector<1x16x256xf32> to vector<16x256xf32>
    %74 = vector.broadcast %39 : vector<16x1xi1> to vector<16x256xi1>
    %75 = vector.broadcast %71 : vector<1x256xi1> to vector<16x256xi1>
    %76 = arith.ori %74, %75 : vector<16x256xi1>
    %cst = arith.constant 0.000000e+00 : f32
    %77 = vector.broadcast %cst : f32 to vector<16x256xf32>
    %78 = arith.select %76, %77, %73 : vector<16x256xi1>, vector<16x256xf32>
    %c0_20 = arith.constant 0 : index
    %c0_21 = arith.constant 0 : index
    %c0_22 = arith.constant 0 : index
    %79 = vector.load %arg7[%c0_20, %c0_21, %c0_22] : memref<2x16x256xf32, #tpu.memory_space<vmem>>, vector<1x16x256xf32>
    %80 = vector.shape_cast %79 : vector<1x16x256xf32> to vector<16x256xf32>
    %81 = vector.shape_cast %78 : vector<16x256xf32> to vector<1x16x256xf32>
    tpu.vector_store %arg7[%c0_20, %c0_21, %c0_22], %81 {strides = array<i32>} : memref<2x16x256xf32, #tpu.memory_space<vmem>>, vector<1x16x256xf32>,
    %c1_i32_23 = arith.constant 1 : i32
    %82 = arith.addi %0, %c1_i32_23 : i32
    %c1_i32_24 = arith.constant 1 : i32
    %83 = arith.minsi %82, %c1_i32_24 : i32
    %c0_i32_25 = arith.constant 0 : i32
    %84 = vector.broadcast %c0_i32_25 : i32 to vector<16x1xi32>
    %85 = arith.cmpi slt, %2, %84 : vector<16x1xi32>
    %c2_i32_26 = arith.constant 2 : i32
    %86 = arith.muli %83, %c2_i32_26 : i32
    %c0_i32_27 = arith.constant 0 : i32
    %87 = arith.addi %86, %c0_i32_27 : i32
    %88 = arith.index_cast %87 : i32 to index
    %89 = memref.load %arg2[%88] : memref<4xi32, #tpu.memory_space<smem>>
    %c2_i32_28 = arith.constant 2 : i32
    %90 = arith.muli %83, %c2_i32_28 : i32
    %c0_i32_29 = arith.constant 0 : i32
    %91 = arith.addi %90, %c0_i32_29 : i32
    %92 = arith.index_cast %91 : i32 to index
    %93 = memref.load %arg3[%92] : memref<4xi32, #tpu.memory_space<smem>>
    %94 = vector.broadcast %89 : i32 to vector<16x1xi32>
    %95 = arith.cmpi sge, %2, %94 : vector<16x1xi32>
    %96 = arith.addi %89, %93 : i32
    %97 = vector.broadcast %96 : i32 to vector<16x1xi32>
    %98 = arith.cmpi slt, %2, %97 : vector<16x1xi32>
    %99 = arith.andi %95, %98 : vector<16x1xi1>
    %100 = arith.ori %85, %99 : vector<16x1xi1>
    %c2_i32_30 = arith.constant 2 : i32
    %101 = arith.muli %83, %c2_i32_30 : i32
    %c1_i32_31 = arith.constant 1 : i32
    %102 = arith.addi %101, %c1_i32_31 : i32
    %103 = arith.index_cast %102 : i32 to index
    %104 = memref.load %arg2[%103] : memref<4xi32, #tpu.memory_space<smem>>
    %c2_i32_32 = arith.constant 2 : i32
    %105 = arith.muli %83, %c2_i32_32 : i32
    %c1_i32_33 = arith.constant 1 : i32
    %106 = arith.addi %105, %c1_i32_33 : i32
    %107 = arith.index_cast %106 : i32 to index
    %108 = memref.load %arg3[%107] : memref<4xi32, #tpu.memory_space<smem>>
    %109 = vector.broadcast %104 : i32 to vector<16x1xi32>
    %110 = arith.cmpi sge, %2, %109 : vector<16x1xi32>
    %111 = arith.addi %104, %108 : i32
    %112 = vector.broadcast %111 : i32 to vector<16x1xi32>
    %113 = arith.cmpi slt, %2, %112 : vector<16x1xi32>
    %114 = arith.andi %110, %113 : vector<16x1xi1>
    %115 = arith.ori %100, %114 : vector<16x1xi1>
    %c0_i32_34 = arith.constant 0 : i32
    %116 = vector.broadcast %c0_i32_34 : i32 to vector<1x256xi32>
    %117 = arith.cmpi slt, %5, %116 : vector<1x256xi32>
    %c2_i32_35 = arith.constant 2 : i32
    %118 = arith.muli %83, %c2_i32_35 : i32
    %c0_i32_36 = arith.constant 0 : i32
    %119 = arith.addi %118, %c0_i32_36 : i32
    %120 = arith.index_cast %119 : i32 to index
    %121 = memref.load %arg4[%120] : memref<4xi32, #tpu.memory_space<smem>>
    %c2_i32_37 = arith.constant 2 : i32
    %122 = arith.muli %83, %c2_i32_37 : i32
    %c0_i32_38 = arith.constant 0 : i32
    %123 = arith.addi %122, %c0_i32_38 : i32
    %124 = arith.index_cast %123 : i32 to index
    %125 = memref.load %arg5[%124] : memref<4xi32, #tpu.memory_space<smem>>
    %126 = vector.broadcast %121 : i32 to vector<1x256xi32>
    %127 = arith.cmpi sge, %5, %126 : vector<1x256xi32>
    %128 = arith.addi %121, %125 : i32
    %129 = vector.broadcast %128 : i32 to vector<1x256xi32>
    %130 = arith.cmpi slt, %5, %129 : vector<1x256xi32>
    %131 = arith.andi %127, %130 : vector<1x256xi1>
    %132 = arith.ori %117, %131 : vector<1x256xi1>
    %c2_i32_39 = arith.constant 2 : i32
    %133 = arith.muli %83, %c2_i32_39 : i32
    %c1_i32_40 = arith.constant 1 : i32
    %134 = arith.addi %133, %c1_i32_40 : i32
    %135 = arith.index_cast %134 : i32 to index
    %136 = memref.load %arg4[%135] : memref<4xi32, #tpu.memory_space<smem>>
    %c2_i32_41 = arith.constant 2 : i32
    %137 = arith.muli %83, %c2_i32_41 : i32
    %c1_i32_42 = arith.constant 1 : i32
    %138 = arith.addi %137, %c1_i32_42 : i32
    %139 = arith.index_cast %138 : i32 to index
    %140 = memref.load %arg5[%139] : memref<4xi32, #tpu.memory_space<smem>>
    %141 = vector.broadcast %136 : i32 to vector<1x256xi32>
    %142 = arith.cmpi sge, %5, %141 : vector<1x256xi32>
    %143 = arith.addi %136, %140 : i32
    %144 = vector.broadcast %143 : i32 to vector<1x256xi32>
    %145 = arith.cmpi slt, %5, %144 : vector<1x256xi32>
    %146 = arith.andi %142, %145 : vector<1x256xi1>
    %147 = arith.ori %132, %146 : vector<1x256xi1>
    %c1 = arith.constant 1 : index
    %c0_43 = arith.constant 0 : index
    %c0_44 = arith.constant 0 : index
    %148 = vector.load %arg6[%c1, %c0_43, %c0_44] : memref<2x16x256xf32, #tpu.memory_space<vmem>>, vector<1x16x256xf32>
    %149 = vector.shape_cast %148 : vector<1x16x256xf32> to vector<16x256xf32>
    %150 = vector.broadcast %115 : vector<16x1xi1> to vector<16x256xi1>
    %151 = vector.broadcast %147 : vector<1x256xi1> to vector<16x256xi1>
    %152 = arith.ori %150, %151 : vector<16x256xi1>
    %cst_45 = arith.constant 0.000000e+00 : f32
    %153 = vector.broadcast %cst_45 : f32 to vector<16x256xf32>
    %154 = arith.select %152, %153, %149 : vector<16x256xi1>, vector<16x256xf32>
    %c1_46 = arith.constant 1 : index
    %c0_47 = arith.constant 0 : index
    %c0_48 = arith.constant 0 : index
    %155 = vector.load %arg7[%c1_46, %c0_47, %c0_48] : memref<2x16x256xf32, #tpu.memory_space<vmem>>, vector<1x16x256xf32>
    %156 = vector.shape_cast %155 : vector<1x16x256xf32> to vector<16x256xf32>
    %157 = vector.shape_cast %154 : vector<16x256xf32> to vector<1x16x256xf32>
    tpu.vector_store %arg7[%c1_46, %c0_47, %c0_48], %157 {strides = array<i32>} : memref<2x16x256xf32, #tpu.memory_space<vmem>>, vector<1x16x256xf32>,
    return
  }
  func.func @transform_0(%arg0: i32, %arg1: i32, %arg2: memref<4xi32, #tpu.memory_space<smem>>, %arg3: memref<4xi32, #tpu.memory_space<smem>>, %arg4: memref<4xi32, #tpu.memory_space<smem>>, %arg5: memref<4xi32, #tpu.memory_space<smem>>) -> (i32, i32, i32) {
    %c0_i32 = arith.constant 0 : i32
    %c0_i32_0 = arith.constant 0 : i32
    return %arg0, %c0_i32, %arg1 : i32, i32, i32
  }
  func.func @transform_1(%arg0: i32, %arg1: i32, %arg2: memref<4xi32, #tpu.memory_space<smem>>, %arg3: memref<4xi32, #tpu.memory_space<smem>>, %arg4: memref<4xi32, #tpu.memory_space<smem>>, %arg5: memref<4xi32, #tpu.memory_space<smem>>) -> (i32, i32, i32) {
    %c0_i32 = arith.constant 0 : i32
    %c0_i32_0 = arith.constant 0 : i32
    return %arg0, %c0_i32, %arg1 : i32, i32, i32
  }
}

</mosaic_0001>

<llo_original>
// kernel: tpu_custom_call.1
$region0: #{tpu_custom_call.1}
  #allocation0 [shape = 'u32[]', space=smem, size = 0x4, offset = 0x4, fixed_abs, tag = 'smem constant byte address 0x4 - core index']
  #allocation1 [shape = 'u32[72,128]{1,0:T(1,128)}', space=vmem, size = 0x9000, scoped, tag = 'internal scratch']
  #allocation2 [shape = 's32[1]{0}', space=sflag, size = 0x4, scoped, tag = 'scoped memory for tpu_custom_call.1']
  #allocation3 [shape = 'u8[512]{0}', space=smem, size = 0x200, scoped, tag = 'prefetched SMEM operand 0']
  #allocation4 [shape = 'u8[512]{0}', space=smem, size = 0x200, scoped, tag = 'prefetched SMEM operand 1']
  #allocation5 [shape = 'u8[512]{0}', space=smem, size = 0x200, scoped, tag = 'prefetched SMEM operand 2']
  #allocation6 [shape = 'u8[512]{0}', space=smem, size = 0x200, scoped, tag = 'prefetched SMEM operand 3']
  %s0 = inlined_call_operand.vmem [shape: s32[4], index: 0, kind: input, shape index: {}]
  %s1 = inlined_call_operand.vmem [shape: s32[4], index: 1, kind: input, shape index: {}]
  %s2 = inlined_call_operand.vmem [shape: s32[4], index: 2, kind: input, shape index: {}]
  %s3 = inlined_call_operand.vmem [shape: s32[4], index: 3, kind: input, shape index: {}]
  %s4 = inlined_call_operand.hbm [shape: f32[2,16,384], index: 4, kind: input, shape index: {}, may-alias: {4,5}]
  %s5 = inlined_call_operand.hbm [shape: f32[2,16,384], index: 5, kind: output, shape index: {}, may-alias: {4,5}]
  %s6 = sld [smem:[#allocation0]]
  $region41: #{tpu_custom_call.1} parent=0
    _
  %s8 = ssub.s32 1, %s6
  %s9 = scalar_select 0, %s8, %s6
  %s11 = sshll.u32 %s0, 4
  %s12 = int_to_ptr.vmem [resolvable:$true] %s11
  %14 = dma.vmem_to_smem %s12, 16, [#allocation3], [#allocation2]
  %s16 = sshll.u32 %s1, 4
  %s17 = int_to_ptr.vmem [resolvable:$true] %s16
  %19 = dma.vmem_to_smem %s17, 16, [#allocation4], [#allocation2]
  %s21 = sshll.u32 %s2, 4
  %s22 = int_to_ptr.vmem [resolvable:$true] %s21
  %24 = dma.vmem_to_smem %s22, 16, [#allocation5], [#allocation2]
  %s26 = sshll.u32 %s3, 4
  %s27 = int_to_ptr.vmem [resolvable:$true] %s26
  %29 = dma.vmem_to_smem %s27, 16, [#allocation6], [#allocation2]
  %31 = dma.done [#allocation2], 64
  %32 = sfence
  $region1: #{tpu_custom_call.1} parent=0
    #allocation7 [shape = 'u8[65536]{0}', space=vmem, size = 0x10000, scoped, tag = 'input window, operand 4']
    #allocation8 [shape = 's32[2]{0}', space=sflag, size = 0x8, scoped, tag = 'scoped memory for tpu_custom_call.1']
    #allocation9 [shape = 's32[2]{0}', space=sflag, size = 0x8, scoped, tag = 'scoped memory for tpu_custom_call.1']
    #allocation10 [shape = 'u8[65536]{0}', space=vmem, size = 0x10000, scoped, tag = 'output window, operand 0']
    %33 = vsyncpa [#allocation8], 0
    %s34 = scalar_lea.sflag [#allocation8], 1
    %35 = vsyncpa %s34, 0
    %36 = vsyncpa [#allocation9], 0
    %s37 = scalar_lea.sflag [#allocation9], 1
    %38 = vsyncpa %s37, 0
    loop: start=0, step=1, limit=4
    $region2: #{tpu_custom_call.1} parent=1 // loop_pre_header
      _
    $region3: #{tpu_custom_call.1} parent=1 // loop_header
      %s40 = sphi 0, %s44
      %p41 = scmp.ge.s32.totalorder %s40, 4
      %s47 = sphi 0, %s59
      %s48 = sphi 0, %s55
      %s49 = sphi 0, %s47
      %s50 = sphi 0, %s48
      %s51 = sphi 0, %s49
      %s52 = sphi 0, %s50
      %s64 = sphi 0, %s66
      %s67 = sphi 0, %s64
      %s68 = sphi 0, %s67
      %s84 = sphi 0, %s68
      %s92 = sphi 0, %s94
      %s95 = sphi 0, %s92
      %s96 = sphi 0, %s95
      %s112 = sphi 0, %s96
    $region4: #{tpu_custom_call.1} parent=1 // loop_header_branch
      %43 = sbr.rel (%p41) target = $region8
    $region5: #{tpu_custom_call.1} parent=1 // loop_body
      %s45 = ssub.s32 %s40, 1
      %s46 = ssub.s32 %s40, 2
      %s53 = sadd.s32 1, %s48
      %p54 = scmp.ge.s32.totalorder %s53, 2
      %s55 = scalar_select %p54, 0, %s53
      %s56 = sadd.s32 1, %s47
      %s57 = scalar_select %p54, %s56, %s47
      %p58 = scmp.ge.s32.totalorder %s57, 1
      %s59 = scalar_select %p58, 0, %s57
      %s60 = ssub.s32 %s47, %s59
      %s61 = ssub.s32 %s48, %s55
      %s62 = sor.u32 %s60, %s61
      %p63 = scmp.eq.s32.totalorder %s62, 0
      %s65 = sadd.s32 %s64, 1
      %s66 = scalar_select %p63, %s64, %s65
      %p69 = pneg %p63
      %p70 = scmp.eq.s32.totalorder %s40, 1
      %p71 = por %p69, %p70
      %p72 = scmp.ne.s32.totalorder %s64, %s67
      %p73 = scmp.eq.s32.totalorder %s40, 0
      %p74 = por %p72, %p73
      %p75 = scmp.ne.s32.totalorder %s64, %s67
      %p76 = scmp.eq.s32.totalorder %s45, 1
      %p77 = por %p75, %p76
      %p78 = scmp.ne.s32.totalorder %s67, %s68
      %p79 = scmp.eq.s32.totalorder %s45, 0
      %p80 = por %p78, %p79
      %p81 = scmp.ne.s32.totalorder %s67, %s68
      %p82 = scmp.eq.s32.totalorder %s46, 1
      %p83 = por %p81, %p82
      %p85 = scmp.ne.s32.totalorder %s68, %s84
      %p86 = scmp.eq.s32.totalorder %s46, 0
      %p87 = por %p85, %p86
      %s88 = ssub.s32 %s47, %s59
      %s89 = ssub.s32 %s48, %s55
      %s90 = sor.u32 %s88, %s89
      %p91 = scmp.eq.s32.totalorder %s90, 0
      %s93 = sadd.s32 %s92, 1
      %s94 = scalar_select %p91, %s92, %s93
      %p97 = pneg %p91
      %p98 = scmp.eq.s32.totalorder %s40, 1
      %p99 = por %p97, %p98
      %p100 = scmp.ne.s32.totalorder %s92, %s95
      %p101 = scmp.eq.s32.totalorder %s40, 0
      %p102 = por %p100, %p101
      %p103 = scmp.ne.s32.totalorder %s92, %s95
      %p104 = scmp.eq.s32.totalorder %s45, 1
      %p105 = por %p103, %p104
      %p106 = scmp.ne.s32.totalorder %s95, %s96
      %p107 = scmp.eq.s32.totalorder %s45, 0
      %p108 = por %p106, %p107
      %p109 = scmp.ne.s32.totalorder %s95, %s96
      %p110 = scmp.eq.s32.totalorder %s46, 1
      %p111 = por %p109, %p110
      %p113 = scmp.ne.s32.totalorder %s96, %s112
      %p114 = scmp.eq.s32.totalorder %s46, 0
      %p115 = por %p113, %p114
      %p116 = scmp.le.s32.totalorder 1, %s40
      %p117 = scmp.lt.s32.totalorder %s40, 3
      %p118 = pnand %p116, %p117
      %p119 = pneg %p118
      // Predicated region
      $region9: #{tpu_custom_call.1} parent=5 // pred_check
        _
      $region10: #{tpu_custom_call.1} parent=5 // pred_check_branch
        %121 = sbr.rel (%p118) target = $region12
      $region11: #{tpu_custom_call.1} parent=5 // pred_region
        %s122 = ssub.s32 %s40, 1
      $region12: #{tpu_custom_call.1} parent=5 // pred_fallthru
        _
      %p123 = scmp.lt.s32.totalorder %s40, 2
      // Predicated region
      $region13: #{tpu_custom_call.1} parent=5 // pred_check
        %p124 = pneg %p123
      $region14: #{tpu_custom_call.1} parent=5 // pred_check_branch
        %126 = sbr.rel (%p124) target = $region16
      $region15: #{tpu_custom_call.1} parent=5 // pred_region
        // Predicated region
        $region17: #{tpu_custom_call.1} parent=15 // pred_check
          %p127 = pneg %p74
        $region18: #{tpu_custom_call.1} parent=15 // pred_check_branch
          %129 = sbr.rel (%p127) target = $region20
        $region19: #{tpu_custom_call.1} parent=15 // pred_region
          %s130 = sand.u32 %s64, 1
          %s131 = scalar_lea.sflag [#allocation8], %s130
          %s132 = sand.u32 %s64, 1
          %s133 = smul.addr %s132, 64
          %s134 = scalar_lea.vmem [#allocation7], %s133
          %s135 = smul.u32 2, %s47
          %s136 = smul.u32 2, %s48
          %s137 = ssub.s32 3, %s136
          %p138 = scmp.lt.s32.totalorder %s137, 2
          %s139 = scalar_select %p138, %s137, 2
          %s140 = smul.u32 32, %s139
          %s141 = ssub.s32 64, %s140
          %s142 = sshll.u32 %s141, 4
          %143 = vsyncadd %s131, %s142
          %p144 = scmp.ne.s32.totalorder 0, %s140
          %s145 = smul.addr %s135, 6
          %s146 = sadd.s32 %s136, %s145
          %s147 = smul.addr %s146, 8
          %s148 = scalar_lea.hbm %s4, %s147
          %s149 = smul.u32 %s139, 8
          %s150 = smul.u32 %s149, 4
          %s151 = sshll.u32 %s148, 4
          %s152 = int_to_ptr.hbm [resolvable:$true] %s151
          %s153 = sshll.u32 %s134, 4
          %s154 = int_to_ptr.vmem [resolvable:$true] %s153
          %s155 = sshll.u32 %s150, 4
          %159 = dma.hbm_to_vmem [thread:$0]  (%p144), %s152, %s155, %s154, %s131, 384, 256, %s149
        $region20: #{tpu_custom_call.1} parent=15 // pred_fallthru
          _
      $region16: #{tpu_custom_call.1} parent=5 // pred_fallthru
        _
      %p160 = scmp.le.s32.totalorder 1, %s40
      %p161 = scmp.lt.s32.totalorder %s40, 3
      %p162 = pnand %p160, %p161
      %p163 = pneg %p162
      // Predicated region
      $region21: #{tpu_custom_call.1} parent=5 // pred_check
        _
      $region22: #{tpu_custom_call.1} parent=5 // pred_check_branch
        %165 = sbr.rel (%p162) target = $region24
      $region23: #{tpu_custom_call.1} parent=5 // pred_region
        %s166 = ssub.s32 %s40, 1
        %s167 = sand.u32 %s67, 1
        %s168 = scalar_lea.sflag [#allocation8], %s167
        %s169 = sand.u32 %s67, 1
        %s170 = smul.addr %s169, 64
        %s171 = scalar_lea.vmem [#allocation7], %s170
        // Predicated region
        $region25: #{tpu_custom_call.1} parent=23 // pred_check
          %p172 = pneg %p80
        $region26: #{tpu_custom_call.1} parent=23 // pred_check_branch
          %174 = sbr.rel (%p172) target = $region28
        $region27: #{tpu_custom_call.1} parent=23 // pred_region
          %176 = dma.done %s168, 1024
        $region28: #{tpu_custom_call.1} parent=23 // pred_fallthru
          _
        %s177 = sand.u32 %s67, 1
        %s178 = scalar_lea.sflag [#allocation8], %s177
        %s179 = sand.u32 %s67, 1
        %s180 = smul.addr %s179, 64
        %s181 = scalar_lea.vmem [#allocation7], %s180
        %p182 = pneg %p80
        %p183 = pneg %p77
        %p184 = pneg %p108
        %p185 = pneg %p105
        %s186 = sand.u32 %s95, 1
        %s187 = scalar_lea.sflag [#allocation9], %s186
        %s188 = sand.u32 %s95, 1
        %s189 = smul.addr %s188, 64
        %s190 = scalar_lea.vmem [#allocation10], %s189
        %s191 = smul.u32 2, %s49
        %s192 = smul.u32 2, %s50
        %s193 = ssub.s32 3, %s192
        %p194 = scmp.lt.s32.totalorder %s193, 2
        %s195 = scalar_select %p194, %s193, 2
        %s196 = smul.u32 32, %s195
        %s197 = smul.u32 2, %s49
        %s198 = smul.u32 2, %s50
        %s199 = ssub.s32 3, %s198
        %p200 = scmp.lt.s32.totalorder %s199, 2
        %s201 = scalar_select %p200, %s199, 2
        %s202 = smul.u32 32, %s201
        %s203 = smul.u32 %s49, 2
        %s204 = smul.u32 %s50, 256
        %v205 = vlaneseq
        %v206 = vshrl.u32 %v205, 7
        %v207 = vadd.s32 %v206, 8
        %v208 = vlaneseq
        %v209 = vand.u32 %v208, 127
        %v210 = vadd.s32 %v209, 128
        %v211 = vstv %s204
        %v212 = vadd.s32 %v209, %v211
        %v213 = vadd.s32 %v210, %v211
        %p214 = scmp.lt.s32.totalorder %s203, 1
        %s215 = scalar_select %p214, %s203, 1
        %vm216 = vcmp.lt.s32.totalorder %v206, 0
        %vm217 = vcmp.lt.s32.totalorder %v207, 0
        %s218 = smul.u32 %s215, 2
        %s219 = sld [smem:[#allocation3 + %s218]]
        %s220 = sld [smem:[#allocation4 + %s218]]
        %v221 = vstv %s219
        %vm222 = vcmp.ge.s32.totalorder %v206, %v221
        %vm223 = vcmp.ge.s32.totalorder %v207, %v221
        %s224 = sadd.s32 %s219, %s220
        %v225 = vstv %s224
        %vm226 = vcmp.lt.s32.totalorder %v206, %v225
        %vm227 = vcmp.lt.s32.totalorder %v207, %v225
        %vm228 = vmand %vm222, %vm226
        %vm229 = vmand %vm223, %vm227
        %vm230 = vmor %vm216, %vm228
        %vm231 = vmor %vm217, %vm229
        %s232 = sadd.s32 %s218, 1
        %s233 = sld [smem:[#allocation3 + %s232]]
        %s234 = sld [smem:[#allocation4 + %s232]]
        %v235 = vstv %s233
        %vm236 = vcmp.ge.s32.totalorder %v206, %v235
        %vm237 = vcmp.ge.s32.totalorder %v207, %v235
        %s238 = sadd.s32 %s233, %s234
        %v239 = vstv %s238
        %vm240 = vcmp.lt.s32.totalorder %v206, %v239
        %vm241 = vcmp.lt.s32.totalorder %v207, %v239
        %vm242 = vmand %vm236, %vm240
        %vm243 = vmand %vm237, %vm241
        %vm244 = vmor %vm230, %vm242
        %vm245 = vmor %vm231, %vm243
        %vm246 = vcmp.lt.s32.totalorder %v212, 0
        %vm247 = vcmp.lt.s32.totalorder %v213, 0
        %s248 = sld [smem:[#allocation5 + %s218]]
        %s249 = sld [smem:[#allocation6 + %s218]]
        %v250 = vstv %s248
        %vm251 = vcmp.ge.s32.totalorder %v212, %v250
        %vm252 = vcmp.ge.s32.totalorder %v213, %v250
        %s253 = sadd.s32 %s248, %s249
        %v254 = vstv %s253
        %vm255 = vcmp.lt.s32.totalorder %v212, %v254
        %vm256 = vcmp.lt.s32.totalorder %v213, %v254
        %vm257 = vmand %vm251, %vm255
        %vm258 = vmand %vm252, %vm256
        %vm259 = vmor %vm246, %vm257
        %vm260 = vmor %vm247, %vm258
        %s261 = sld [smem:[#allocation5 + %s232]]
        %s262 = sld [smem:[#allocation6 + %s232]]
        %v263 = vstv %s261
        %vm264 = vcmp.ge.s32.totalorder %v212, %v263
        %vm265 = vcmp.ge.s32.totalorder %v213, %v263
        %s266 = sadd.s32 %s261, %s262
        %v267 = vstv %s266
        %vm268 = vcmp.lt.s32.totalorder %v212, %v267
        %vm269 = vcmp.lt.s32.totalorder %v213, %v267
        %vm270 = vmand %vm264, %vm268
        %vm271 = vmand %vm265, %vm269
        %vm272 = vmor %vm259, %vm270
        %vm273 = vmor %vm260, %vm271
        %v274 = vld [vmem:[%s171] sm:$0xff]
        %v275 = vld [vmem:[%s171 + $0x8] sm:$0xff]
        %v276 = vld [vmem:[%s171 + $0x10] sm:$0xff]
        %v277 = vld [vmem:[%s171 + $0x18] sm:$0xff]
        %v278 = vsel %vm244, 1, 0
        %v279 = vsel %vm245, 1, 0
        %vm280 = vcmp.eq.s32.totalorder %v278, 1
        %vm281 = vcmp.eq.s32.totalorder %v279, 1
        %v282 = vsel %vm272, 1, 0
        %v283 = vsel %vm273, 1, 0
        %vm284 = vcmp.eq.s32.totalorder %v282, 1
        %vm285 = vcmp.eq.s32.totalorder %v283, 1
        %vm286 = vmor %vm280, %vm284
        %vm287 = vmor %vm280, %vm285
        %vm288 = vmor %vm281, %vm284
        %vm289 = vmor %vm281, %vm285
        %v290 = vsel %vm286, 0.0, %v274
        %v291 = vsel %vm287, 0.0, %v275
        %v292 = vsel %vm288, 0.0, %v276
        %v293 = vsel %vm289, 0.0, %v277
        %294 = vst [vmem:[%s190] sm:$0xff] %v290
        %295 = vst [vmem:[%s190 + $0x8] sm:$0xff] %v291
        %296 = vst [vmem:[%s190 + $0x10] sm:$0xff] %v292
        %297 = vst [vmem:[%s190 + $0x18] sm:$0xff] %v293
        %s298 = sadd.s32 %s203, 1
        %p299 = scmp.lt.s32.totalorder %s298, 1
        %s300 = scalar_select %p299, %s298, 1
        %s301 = smul.u32 %s300, 2
        %s302 = sld [smem:[#allocation3 + %s301]]
        %s303 = sld [smem:[#allocation4 + %s301]]
        %v304 = vstv %s302
        %vm305 = vcmp.ge.s32.totalorder %v206, %v304
        %vm306 = vcmp.ge.s32.totalorder %v207, %v304
        %s307 = sadd.s32 %s302, %s303
        %v308 = vstv %s307
        %vm309 = vcmp.lt.s32.totalorder %v206, %v308
        %vm310 = vcmp.lt.s32.totalorder %v207, %v308
        %vm311 = vmand %vm305, %vm309
        %vm312 = vmand %vm306, %vm310
        %vm313 = vmor %vm216, %vm311
        %vm314 = vmor %vm217, %vm312
        %s315 = sadd.s32 %s301, 1
        %s316 = sld [smem:[#allocation3 + %s315]]
        %s317 = sld [smem:[#allocation4 + %s315]]
        %v318 = vstv %s316
        %vm319 = vcmp.ge.s32.totalorder %v206, %v318
        %vm320 = vcmp.ge.s32.totalorder %v207, %v318
        %s321 = sadd.s32 %s316, %s317
        %v322 = vstv %s321
        %vm323 = vcmp.lt.s32.totalorder %v206, %v322
        %vm324 = vcmp.lt.s32.totalorder %v207, %v322
        %vm325 = vmand %vm319, %vm323
        %vm326 = vmand %vm320, %vm324
        %vm327 = vmor %vm313, %vm325
        %vm328 = vmor %vm314, %vm326
        %s329 = sld [smem:[#allocation5 + %s301]]
        %s330 = sld [smem:[#allocation6 + %s301]]
        %v331 = vstv %s329
        %vm332 = vcmp.ge.s32.totalorder %v212, %v331
        %vm333 = vcmp.ge.s32.totalorder %v213, %v331
        %s334 = sadd.s32 %s329, %s330
        %v335 = vstv %s334
        %vm336 = vcmp.lt.s32.totalorder %v212, %v335
        %vm337 = vcmp.lt.s32.totalorder %v213, %v335
        %vm338 = vmand %vm332, %vm336
        %vm339 = vmand %vm333, %vm337
        %vm340 = vmor %vm246, %vm338
        %vm341 = vmor %vm247, %vm339
        %s342 = sld [smem:[#allocation5 + %s315]]
        %s343 = sld [smem:[#allocation6 + %s315]]
        %v344 = vstv %s342
        %vm345 = vcmp.ge.s32.totalorder %v212, %v344
        %vm346 = vcmp.ge.s32.totalorder %v213, %v344
        %s347 = sadd.s32 %s342, %s343
        %v348 = vstv %s347
        %vm349 = vcmp.lt.s32.totalorder %v212, %v348
        %vm350 = vcmp.lt.s32.totalorder %v213, %v348
        %vm351 = vmand %vm345, %vm349
        %vm352 = vmand %vm346, %vm350
        %vm353 = vmor %vm340, %vm351
        %vm354 = vmor %vm341, %vm352
        %s355 = scalar_lea.vmem %s171, 32 [#allocation7]
        %v356 = vld [vmem:[%s355] sm:$0xff]
        %v357 = vld [vmem:[%s355 + $0x8] sm:$0xff]
        %v358 = vld [vmem:[%s355 + $0x10] sm:$0xff]
        %v359 = vld [vmem:[%s355 + $0x18] sm:$0xff]
        %v360 = vsel %vm327, 1, 0
        %v361 = vsel %vm328, 1, 0
        %vm362 = vcmp.eq.s32.totalorder %v360, 1
        %vm363 = vcmp.eq.s32.totalorder %v361, 1
        %v364 = vsel %vm353, 1, 0
        %v365 = vsel %vm354, 1, 0
        %vm366 = vcmp.eq.s32.totalorder %v364, 1
        %vm367 = vcmp.eq.s32.totalorder %v365, 1
        %vm368 = vmor %vm362, %vm366
        %vm369 = vmor %vm362, %vm367
        %vm370 = vmor %vm363, %vm366
        %vm371 = vmor %vm363, %vm367
        %v372 = vsel %vm368, 0.0, %v356
        %v373 = vsel %vm369, 0.0, %v357
        %v374 = vsel %vm370, 0.0, %v358
        %v375 = vsel %vm371, 0.0, %v359
        %s376 = scalar_lea.vmem %s190, 32 [#allocation10]
        %377 = vst [vmem:[%s376] sm:$0xff] %v372
        %378 = vst [vmem:[%s376 + $0x8] sm:$0xff] %v373
        %379 = vst [vmem:[%s376 + $0x10] sm:$0xff] %v374
        %380 = vst [vmem:[%s376 + $0x18] sm:$0xff] %v375
        %s381 = sand.u32 %s95, 1
        %s382 = scalar_lea.sflag [#allocation9], %s381
        %s383 = sand.u32 %s95, 1
        %s384 = smul.addr %s383, 64
        %s385 = scalar_lea.vmem [#allocation10], %s384
        // Predicated region
        $region29: #{tpu_custom_call.1} parent=23 // pred_check
          %p386 = pneg %p105
        $region30: #{tpu_custom_call.1} parent=23 // pred_check_branch
          %388 = sbr.rel (%p386) target = $region32
        $region31: #{tpu_custom_call.1} parent=23 // pred_region
          %s389 = smul.u32 2, %s49
          %s390 = smul.u32 2, %s50
          %s391 = ssub.s32 3, %s390
          %p392 = scmp.lt.s32.totalorder %s391, 2
          %s393 = scalar_select %p392, %s391, 2
          %s394 = smul.u32 32, %s393
          %s395 = ssub.s32 64, %s394
          %s396 = sshll.u32 %s395, 4
          %397 = vsyncadd %s382, %s396
          %p398 = scmp.ne.s32.totalorder 0, %s394
          %s399 = smul.addr %s389, 6
          %s400 = sadd.s32 %s390, %s399
          %s401 = smul.addr %s400, 8
          %s402 = scalar_lea.hbm %s5, %s401
          %s403 = smul.u32 %s393, 8
          %s404 = smul.u32 %s403, 4
          %s405 = sshll.u32 %s385, 4
          %s406 = int_to_ptr.vmem [resolvable:$true] %s405
          %s407 = sshll.u32 %s402, 4
          %s408 = int_to_ptr.hbm [resolvable:$true] %s407
          %s409 = sshll.u32 %s404, 4
          %413 = dma.vmem_to_hbm [thread:$0]  (%p398), %s406, %s409, %s408, %s382, 256, 384, %s403
        $region32: #{tpu_custom_call.1} parent=23 // pred_fallthru
          _
      $region24: #{tpu_custom_call.1} parent=5 // pred_fallthru
        _
      %p414 = scmp.le.s32.totalorder 2, %s40
      // Predicated region
      $region33: #{tpu_custom_call.1} parent=5 // pred_check
        %p415 = pneg %p414
      $region34: #{tpu_custom_call.1} parent=5 // pred_check_branch
        %417 = sbr.rel (%p415) target = $region36
      $region35: #{tpu_custom_call.1} parent=5 // pred_region
        %s418 = ssub.s32 %s40, 2
        // Predicated region
        $region37: #{tpu_custom_call.1} parent=35 // pred_check
          %p419 = pneg %p111
        $region38: #{tpu_custom_call.1} parent=35 // pred_check_branch
          %421 = sbr.rel (%p419) target = $region40
        $region39: #{tpu_custom_call.1} parent=35 // pred_region
          %s422 = sand.u32 %s96, 1
          %s423 = scalar_lea.sflag [#allocation9], %s422
          %s424 = sand.u32 %s96, 1
          %s425 = smul.addr %s424, 64
          %s426 = scalar_lea.vmem [#allocation10], %s425
          %428 = dma.done %s423, 1024
        $region40: #{tpu_custom_call.1} parent=35 // pred_fallthru
          _
      $region36: #{tpu_custom_call.1} parent=5 // pred_fallthru
        _
    $region6: #{tpu_custom_call.1} parent=1 // loop_footer
      %s44 = sadd.s32 1, %s40
    $region7: #{tpu_custom_call.1} parent=1 // loop_footer_branch
      %39 = sbr.rel target = $region3
    $region8: #{tpu_custom_call.1} parent=1 // loop_exit
      _
    %429 = vsyncpa [#allocation8], 1
    %s430 = scalar_lea.sflag [#allocation8], 1
    %431 = vsyncpa %s430, 1
    %432 = vsyncpa [#allocation9], 1
    %s433 = scalar_lea.sflag [#allocation9], 1
    %434 = vsyncpa %s433, 1

</llo_original>
